<compile_context>
chip_gen: v6e
topology: v6e:2x2x1
jax: 0.10.0
libtpu: 0.0.40
codegen_flags: <defaults>
</compile_context>

<pallas_src>
import jax
import jax.numpy as jnp
from jax.experimental import pallas as pl
from jax.experimental.pallas import tpu as pltpu


# Budget for the double-buffered x tiles (comfortably inside v5e's 16 MiB /
# v6e's 32 MiB / v7x's 32 MiB scoped-VMEM defaults, with headroom for w/out).
_VMEM_X_BUDGET = 8 * 1024 * 1024


def _round_up(v, m):
    return (v + m - 1) // m * m


def _net_kernel(x_ref, w_ref, b_ref, o_ref):
    # x_ref: (TB, N) VMEM   w_ref: (1, N) VMEM   b_ref: (1, 1) SMEM
    # o_ref: (1, TB) VMEM   (lane-dense: batch on the lane axis)
    prod = x_ref[...] * w_ref[...]            # VPU: (1,N) row broadcast over TB rows
    row = jnp.sum(prod, axis=1)               # XLU lane-reduce -> (TB,)
    y = row[None, :] + b_ref[0, 0]            # (1, TB), bias scalar from SMEM
    # Exact sigmoid (pl.reciprocal(approx=True) deliberately not used: keeps
    # the 1e-6 reference tolerance).
    o_ref[...] = (1.0 / (1.0 + jnp.exp(-y))).astype(o_ref.dtype)


def net_forward(x, w, b, *, block_b=512):
    """sigmoid(x @ w.T + b), matching PyTorch Net.forward.

    x: [B, N] float32
    w: [1, N] float32  (PyTorch nn.Linear(n, 1).weight layout)
    b: [1, 1] float32  (bias, reshaped from PyTorch's (1,))
    returns: [B, 1]
    """
    B, N = x.shape
    assert w.shape == (1, N)
    b = jnp.asarray(b, dtype=x.dtype).reshape(1, 1)

    # ---- batch-tile selection (generation-aware VMEM sizing) ----
    bytes_per_row = N * x.dtype.itemsize
    cap_rows = max(128, (_VMEM_X_BUDGET // (2 * bytes_per_row)) // 128 * 128)
    tb = min(block_b, cap_rows)
    if B <= tb:
        # Single tile: block == full (padded) array, so the (8,128) divisibility
        # exemption applies; just round rows up to the f32 sublane multiple.
        TB = _round_up(max(B, 1), 8)
    else:
        # Multi-tile: TB must be a multiple of 128 so the lane-dense (1, TB)
        # output block satisfies the lane-divisibility rule (and of 8 for x).
        TB = _round_up(tb, 128)

    B_pad = _round_up(B, TB)
    if B_pad != B:
        x = jnp.pad(x, ((0, B_pad - B), (0, 0)))  # zero-pad tail rows (sliced off below)
    grid = (B_pad // TB,)

    out_row = pl.pallas_call(
        _net_kernel,
        out_shape=jax.ShapeDtypeStruct((1, B_pad), x.dtype),
        grid_spec=pltpu.PrefetchScalarGridSpec(
            num_scalar_prefetch=0,
            grid=grid,
            in_specs=[
                # x: streamed batch tiles, double-buffered by the pipeline.
                pl.BlockSpec((TB, N), lambda i: (i, 0)),
                # w: same block every step -> stays resident in VMEM.
                pl.BlockSpec((1, N), lambda i: (0, 0)),
                # bias: scalar in SMEM (no padded VMEM tile / extra DMA).
                pl.BlockSpec(memory_space=pltpu.MemorySpace.SMEM),
            ],
            # Lane-dense output slab: batch on the lane axis.
            out_specs=pl.BlockSpec((1, TB), lambda i: (0, i)),
        ),
        compiler_params=pltpu.CompilerParams(
            # Batch tiles are independent -> shardable across TensorCores (v7x).
            dimension_semantics=("parallel",),
        ),
    )(x, w, b)

    # Back to PyTorch's (B, 1) layout; drop padded tail rows.
    return out_row[0, :B][:, None]


if __name__ == "__main__":
    key = jax.random.PRNGKey(0)
    k_x, k_w, k_b, k_x2 = jax.random.split(key, 4)

    # Small shapes consistent with Net(n=32) on a batch of 8.
    B, N = 8, 32
    x = jax.random.normal(k_x, (B, N), dtype=jnp.float32)

    # nn.Linear-style uniform(-1/sqrt(n), 1/sqrt(n)) init; w keeps PyTorch's
    # (out_features=1, in_features=N) layout, bias reshaped to (1, 1).
    bound = 1.0 / (N ** 0.5)
    w = jax.random.uniform(k_w, (1, N), minval=-bound, maxval=bound,
                           dtype=jnp.float32)
    b = jax.random.uniform(k_b, (1, 1), minval=-bound, maxval=bound,
                           dtype=jnp.float32)

    # Check 1: tiny batch (single tile).
    out = net_forward(x, w, b)
    jax.block_until_ready(out)
    ref = jax.nn.sigmoid(x @ w.T + b)
    assert out.shape == (B, 1)
    assert jnp.allclose(out, ref, atol=1e-6), "mismatch vs reference (small)"

    # Check 2: multi-tile path with a padded tail (B=200, TB=128 -> grid=2).
    B2 = 200
    x2 = jax.random.normal(k_x2, (B2, N), dtype=jnp.float32)
    out2 = net_forward(x2, w, b, block_b=128)
    jax.block_until_ready(out2)
    ref2 = jax.nn.sigmoid(x2 @ w.T + b)
    assert out2.shape == (B2, 1)
    assert jnp.allclose(out2, ref2, atol=1e-6), "mismatch vs reference (tiled)"

    print("KERNEL_OK")
</pallas_src>

<mosaic_0001>
module attributes {stable_mosaic.version = 11 : i64} {
  func.func @_net_kernel(%arg0: i32, %arg1: memref<8x32xf32, #tpu.memory_space<vmem>>, %arg2: memref<1x32xf32, #tpu.memory_space<vmem>>, %arg3: memref<1x1xf32, #tpu.memory_space<smem>>, %arg4: memref<1x8xf32, #tpu.memory_space<vmem>>) attributes {dimension_semantics = [#tpu.dimension_semantics<parallel>], iteration_bounds = array<i64: 1>, scalar_prefetch = 0 : i64, scratch_operands = 0 : i64, tpu.core_type = #tpu.core_type<tc>, window_params = [{transform_indices = @transform_0, window_bounds = array<i64: 8, 32>}, {pipeline_mode = #tpu.pipeline_mode<synchronous>, transform_indices = @transform_1, window_bounds = array<i64: 1, 32>}, {transform_indices = @transform_2, window_bounds = array<i64: 1, 1>}, {transform_indices = @transform_3, window_bounds = array<i64: 1, 8>}]} {
    %c0 = arith.constant 0 : index
    %c0_0 = arith.constant 0 : index
    %0 = vector.load %arg1[%c0, %c0_0] : memref<8x32xf32, #tpu.memory_space<vmem>>, vector<8x32xf32>
    %c0_1 = arith.constant 0 : index
    %c0_2 = arith.constant 0 : index
    %1 = vector.load %arg2[%c0_1, %c0_2] : memref<1x32xf32, #tpu.memory_space<vmem>>, vector<1x32xf32>
    %2 = vector.broadcast %1 : vector<1x32xf32> to vector<8x32xf32>
    %3 = arith.mulf %0, %2 : vector<8x32xf32>
    %cst = arith.constant dense<0.000000e+00> : vector<8xf32>
    %4 = vector.multi_reduction <add>, %3, %cst [1] : vector<8x32xf32> to vector<8xf32>
    %5 = vector.shape_cast %4 : vector<8xf32> to vector<1x8xf32>
    %c0_3 = arith.constant 0 : index
    %c0_4 = arith.constant 0 : index
    %6 = memref.load %arg3[%c0_3, %c0_4] : memref<1x1xf32, #tpu.memory_space<smem>>
    %7 = vector.broadcast %6 : f32 to vector<1x8xf32>
    %8 = arith.addf %5, %7 : vector<1x8xf32>
    %cst_5 = arith.constant 0.000000e+00 : f32
    %9 = vector.broadcast %cst_5 : f32 to vector<1x8xf32>
    %10 = arith.subf %9, %8 : vector<1x8xf32>
    %11 = math.exp %10 : vector<1x8xf32>
    %cst_6 = arith.constant 1.000000e+00 : f32
    %12 = vector.broadcast %cst_6 : f32 to vector<1x8xf32>
    %13 = arith.addf %12, %11 : vector<1x8xf32>
    %cst_7 = arith.constant 1.000000e+00 : f32
    %14 = vector.broadcast %cst_7 : f32 to vector<1x8xf32>
    %15 = arith.divf %14, %13 : vector<1x8xf32>
    %c0_8 = arith.constant 0 : index
    %c0_9 = arith.constant 0 : index
    %16 = vector.load %arg4[%c0_8, %c0_9] : memref<1x8xf32, #tpu.memory_space<vmem>>, vector<1x8xf32>
    tpu.vector_store %arg4[%c0_8, %c0_9], %15 {strides = array<i32>} : memref<1x8xf32, #tpu.memory_space<vmem>>, vector<1x8xf32>,
    return
  }
  func.func @transform_0(%arg0: i32) -> (i32, i32) {
    %c0_i32 = arith.constant 0 : i32
    %c0_i32_0 = arith.constant 0 : i32
    return %arg0, %c0_i32 : i32, i32
  }
  func.func @transform_1(%arg0: i32) -> (i32, i32) {
    %c0_i32 = arith.constant 0 : i32
    %c0_i32_0 = arith.constant 0 : i32
    %c0_i32_1 = arith.constant 0 : i32
    return %c0_i32, %c0_i32_0 : i32, i32
  }
  func.func @transform_2(%arg0: i32) -> (i32, i32) {
    %c0_i32 = arith.constant 0 : i32
    %c0_i32_0 = arith.constant 0 : i32
    %c0_i32_1 = arith.constant 0 : i32
    return %c0_i32, %c0_i32_0 : i32, i32
  }
  func.func @transform_3(%arg0: i32) -> (i32, i32) {
    %c0_i32 = arith.constant 0 : i32
    %c0_i32_0 = arith.constant 0 : i32
    return %c0_i32, %arg0 : i32, i32
  }
}

</mosaic_0001>

<llo_original>
// kernel: tpu_custom_call.1
$region0: #{tpu_custom_call.1}
  #allocation0 [shape = 'u32[]', space=smem, size = 0x4, offset = 0x4, fixed_abs, tag = 'smem constant byte address 0x4 - core index']
  #allocation1 [shape = 'u32[144,128]{1,0:T(1,128)}', space=vmem, size = 0x12000, scoped, tag = 'internal scratch']
  #allocation2 [shape = 'f32[1,1]{1,0:T(1,128)S(6)}', space=smem, size = 0x200, scoped, tag = 'scoped memory for tpu_custom_call.1']
  %s0 = inlined_call_operand.hbm [shape: f32[8,32], index: 0, kind: input, shape index: {}]
  %s1 = inlined_call_operand.vmem [shape: f32[1,32], index: 1, kind: input, shape index: {}]
  %s2 = inlined_call_operand.<no memory space> [shape: f32[1,1], index: 2, kind: input, shape index: {}]
  %s3 = inlined_call_operand.hbm [shape: f32[1,8], index: 3, kind: output, shape index: {}]
  %s4 = sld [smem:[#allocation0]]
  $region26: #{tpu_custom_call.1} parent=0
    _
  %s6 = ssub.s32 1, %s4
  %s7 = scalar_select 0, %s6, %s4
  %8 = sst [smem:[#allocation2]] %s2
  $region1: #{tpu_custom_call.1} parent=0
    #allocation3 [shape = 'u8[4096]{0}', space=vmem, size = 0x1000, scoped, tag = 'input window, operand 0, single buffered']
    #allocation4 [shape = 's32[1]{0}', space=sflag, size = 0x4, scoped, tag = 'scoped memory for tpu_custom_call.1']
    #allocation5 [shape = 's32[1]{0}', space=sflag, size = 0x4, scoped, tag = 'scoped memory for tpu_custom_call.1']
    #allocation6 [shape = 'u8[512]{0}', space=vmem, size = 0x400, scoped, tag = 'output window, operand 0, single buffered']
    %9 = vsyncpa [#allocation4], 0
    %10 = vsyncpa [#allocation5], 0
    // Predicated region
    $region2: #{tpu_custom_call.1} parent=1 // pred_check
      _
    $region3: #{tpu_custom_call.1} parent=1 // pred_check_branch
      %12 = sbr.rel (0) target = $region5
    $region4: #{tpu_custom_call.1} parent=1 // pred_region
      %s14 = ssub.s32 128, 128
      %15 = vsyncadd [#allocation4], %s14
      %s17 = sshll.u32 [#allocation3], 4
      %s18 = int_to_ptr.vmem [resolvable:$true] %s17
      %20 = dma.hbm_to_vmem [thread:$0]  %s0, 128, %s18, [#allocation4]
    $region5: #{tpu_custom_call.1} parent=1 // pred_fallthru
      _
    // Predicated region
    $region6: #{tpu_custom_call.1} parent=1 // pred_check
      _
    $region7: #{tpu_custom_call.1} parent=1 // pred_check_branch
      %22 = sbr.rel (0) target = $region9
    $region8: #{tpu_custom_call.1} parent=1 // pred_region
      _
    $region9: #{tpu_custom_call.1} parent=1 // pred_fallthru
      _
    // Predicated region
    $region10: #{tpu_custom_call.1} parent=1 // pred_check
      _
    $region11: #{tpu_custom_call.1} parent=1 // pred_check_branch
      %24 = sbr.rel (0) target = $region13
    $region12: #{tpu_custom_call.1} parent=1 // pred_region
      _
    $region13: #{tpu_custom_call.1} parent=1 // pred_fallthru
      _
    // Predicated region
    $region14: #{tpu_custom_call.1} parent=1 // pred_check
      _
    $region15: #{tpu_custom_call.1} parent=1 // pred_check_branch
      %26 = sbr.rel (0) target = $region17
    $region16: #{tpu_custom_call.1} parent=1 // pred_region
      %27 = dma.done [#allocation4], 128
    $region17: #{tpu_custom_call.1} parent=1 // pred_fallthru
      _
    %v28 = vld [vmem:[#allocation3] sm:$0xff]
    %v29 = vld [vmem:[%s1] sm:$0x1]
    %v31 = vlaneseq
    %v32 = vshrl.u32 %v31, 7
    %v33 = vsub.s32 0, %v32
    %v34 = vrot.slane %v29, %v33
    %v36 = vmul.f32 %v28, %v34
    %vm37 = vcmask 261120
    %v38 = vsel %vm37, %v36, 0.0
    %39 = vadd.xlane.f32.xlu0 %v38
    %v40 = vpop.xlane.xlu0 %39
    %s41 = sld [smem:[#allocation2]]
    %v42 = vstv %s41
    %v43 = vadd.f32 %v40, %v42
    %v44 = vsub.f32 0.0, %v43
    %v45 = vmul.f32 %v44, 1.442695
    %v46 = vpow.pop %v45
    %v47 = vadd.f32 %v46, 1.0
    %v48 = vrcp.pop %v47
    %v49 = vmul.f32 1.0, %v48
    %v51 = vlaneseq
    %v52 = vand.u32 %v51, 127
    %v53 = vlaneseq
    %v54 = vshrl.u32 %v53, 7
    %v55 = vsub.s32 %v52, %v54
    %v56 = vrot.slane %v49, %v55
    %vm58 = vcmask 57344
    %59 = vst.msk [vmem:[#allocation6] sm:$0x1] %vm58, %v56
    // Predicated region
    $region18: #{tpu_custom_call.1} parent=1 // pred_check
      _
    $region19: #{tpu_custom_call.1} parent=1 // pred_check_branch
      %61 = sbr.rel (0) target = $region21
    $region20: #{tpu_custom_call.1} parent=1 // pred_region
      %s63 = ssub.s32 16, 16
      %64 = vsyncadd [#allocation5], %s63
      %s66 = sshll.u32 [#allocation6], 4
      %s67 = int_to_ptr.vmem [resolvable:$true] %s66
      %69 = dma.vmem_to_hbm [thread:$0]  %s67, 16, %s3, [#allocation5]
    $region21: #{tpu_custom_call.1} parent=1 // pred_fallthru
      _
    // Predicated region
    $region22: #{tpu_custom_call.1} parent=1 // pred_check
      _
    $region23: #{tpu_custom_call.1} parent=1 // pred_check_branch
      %71 = sbr.rel (0) target = $region25
    $region24: #{tpu_custom_call.1} parent=1 // pred_region
      %72 = dma.done [#allocation5], 16
    $region25: #{tpu_custom_call.1} parent=1 // pred_fallthru
      _
    %73 = vsyncpa [#allocation4], 1
    %74 = vsyncpa [#allocation5], 1

</llo_original>
